<compile_context>
chip_gen: v6e
topology: v6e:2x2x1
jax: 0.10.0
libtpu: 0.0.40
codegen_flags: <defaults>
</compile_context>

<pallas_src>
import functools

import jax
import jax.numpy as jnp
from jax.experimental import pallas as pl
from jax.experimental.pallas import tpu as pltpu


def _round_up(x, m):
    return ((x + m - 1) // m) * m


def _cdiv(a, b):
    return -(-a // b)


@functools.lru_cache(maxsize=None)
def _tpu_config():
    """(lane_align for cout padding, vmem_limit_bytes) — generation aware."""
    kind = ""
    try:
        kind = jax.devices()[0].device_kind.lower()
    except Exception:
        pass
    big_vmem = ("v5" in kind) or ("v6" in kind)          # 128 MiB VMEM parts
    lane_align = 256 if ("v6" in kind or "v7" in kind) else 128
    vmem_cap = (128 if big_vmem else 64) * 1024 * 1024   # conservative default
    try:
        vmem_cap = int(pltpu.get_tpu_info().vmem_capacity_bytes)
    except Exception:
        pass
    hard_cap = (64 if big_vmem else 40) * 1024 * 1024
    vmem_limit = int(min(hard_cap, (vmem_cap * 5) // 8))
    return lane_align, vmem_limit


def _sublane(itemsize):
    return 8 if itemsize >= 4 else (16 if itemsize == 2 else 32)


def _fit_rows(R, sub, target, per_row_bytes, fixed_bytes, budget):
    """Shape-aware, VMEM-budgeted row tile.  Returns (TM, R_pad)."""
    target = max(sub, min(target, _round_up(R, sub)))
    while True:
        n = max(1, _cdiv(R, target))
        if n == 1:
            TM = R                       # single tile: block == full (unpadded) dim
        else:
            TM = _round_up(_cdiv(R, n), sub)
        if fixed_bytes + TM * per_row_bytes <= budget or TM <= sub:
            return TM, TM * n
        target = max(sub, target // 2)


# ----------------------------------------------------------------------------
# Kernels
# ----------------------------------------------------------------------------
def _dense_direct_kernel(x_ref, w_ref, b_ref, o_ref):
    # Single-K-tile: no scratch accumulator, no init/finalize.
    o_ref[...] = (
        jnp.dot(x_ref[...], w_ref[...], preferred_element_type=jnp.float32)
        + b_ref[...]
    ).astype(o_ref.dtype)


def _dense_acc_kernel(x_ref, w_ref, b_ref, o_ref, acc_ref):
    k = pl.program_id(2)

    @pl.when(k == 0)
    def _():
        acc_ref[...] = jnp.zeros_like(acc_ref)

    acc_ref[...] += jnp.dot(x_ref[...], w_ref[...],
                            preferred_element_type=jnp.float32)

    @pl.when(k == pl.num_programs(2) - 1)
    def _():
        o_ref[...] = (acc_ref[...] + b_ref[...]).astype(o_ref.dtype)


def _cl_direct_kernel(w_ref, x_ref, b_ref, o_ref):
    # y[b] = W^T @ x[b]  (channel-last, single K tile; W^T fully resident).
    o_ref[0] = (
        jnp.dot(w_ref[...], x_ref[0], preferred_element_type=jnp.float32)
        + b_ref[...]
    ).astype(o_ref.dtype)


def _cl_acc_kernel(w_ref, x_ref, b_ref, o_ref, acc_ref):
    k = pl.program_id(2)

    @pl.when(k == 0)
    def _():
        acc_ref[...] = jnp.zeros_like(acc_ref)

    acc_ref[...] += jnp.dot(w_ref[...], x_ref[0],
                            preferred_element_type=jnp.float32)

    @pl.when(k == pl.num_programs(2) - 1)
    def _():
        o_ref[0] = (acc_ref[...] + b_ref[...]).astype(o_ref.dtype)


def _grouped_kernel(x_ref, w_ref, b_ref, o_ref):
    # x_ref : [TB, GB, M]   (original [B, G, M] layout — no HBM transpose)
    # w_ref : [GB, M, N]    b_ref : [GB, N]
    # o_ref : [TB, GB*N]    (flat, lane-major view of [TB, GB, N])
    n = w_ref.shape[2]
    x_all = x_ref[...]
    b_all = b_ref[...]
    for g in range(w_ref.shape[0]):                   # static unroll, GB <= 16
        acc = jnp.dot(x_all[:, g, :], w_ref[g],
                      preferred_element_type=jnp.float32)
        o_ref[:, g * n:(g + 1) * n] = (acc + b_all[g:g + 1, :]).astype(o_ref.dtype)


# ----------------------------------------------------------------------------
# groups == 1, channel-first:  (R, M) @ (M, N) + bias
# ----------------------------------------------------------------------------
def _dense_matmul_2d(x2d, W, bias):
    R, M = x2d.shape
    N = W.shape[1]
    lane_align, vmem_limit = _tpu_config()
    budget = (vmem_limit * 3) // 4
    isize = x2d.dtype.itemsize
    sub = _sublane(isize)

    # ---- N (cout): lane-dense output tiles ---------------------------------
    n_align = 128 if N <= 128 else lane_align
    N_pad = _round_up(N, n_align)
    if N_pad <= 1024:
        TN, n_tiles = N_pad, 1
    else:
        TN = 256
        N_pad = _round_up(N, TN)
        n_tiles = N_pad // TN

    # ---- M (cin, contraction): K-tile only when large ----------------------
    if M <= 2048:
        TK, M_pad, k_tiles = M, M, 1        # full-K block, no activation padding
    else:
        M128 = _round_up(M, 128)
        k_tiles = _cdiv(M128, 512)
        TK = _round_up(_cdiv(M128, k_tiles), 128)
        M_pad = TK * k_tiles

    # ---- rows: shape-aware tile fit into the VMEM budget -------------------
    if k_tiles == 1 and n_tiles == 1:
        # Whole W + bias VMEM-resident (constant index_map): common 1x1 case.
        fixed = 2 * (M_pad * N_pad + N_pad) * isize
        per_row = 2 * (M_pad + N_pad) * isize
        tm_target = 1024 if vmem_limit >= (48 << 20) else 512
    elif k_tiles == 1:
        fixed = 2 * (M_pad * TN + TN) * isize
        per_row = 2 * (M_pad + TN) * isize
        tm_target = 512
    else:
        fixed = 2 * (TK * TN + TN) * isize
        per_row = 2 * (TK + TN) * isize + TN * 4        # + f32 accumulator
        tm_target = 512
    TM, R_pad = _fit_rows(R, sub, tm_target, per_row, fixed, budget)
    r_tiles = R_pad // TM

    # ---- zero-padding only where required -----------------------------------
    if (R_pad, M_pad) != (R, M):
        x2d = jnp.pad(x2d, ((0, R_pad - R), (0, M_pad - M)))
    if (M_pad, N_pad) != W.shape:
        W = jnp.pad(W, ((0, M_pad - W.shape[0]), (0, N_pad - W.shape[1])))
    if N_pad != bias.shape[1]:
        bias = jnp.pad(bias, ((0, 0), (0, N_pad - bias.shape[1])))

    out_shape = jax.ShapeDtypeStruct((R_pad, N_pad), x2d.dtype)
    cp = lambda sem: pltpu.CompilerParams(dimension_semantics=sem,
                                          vmem_limit_bytes=vmem_limit)

    if k_tiles == 1 and n_tiles == 1:
        out = pl.pallas_call(
            _dense_direct_kernel,
            out_shape=out_shape,
            grid_spec=pltpu.PrefetchScalarGridSpec(
                num_scalar_prefetch=0,
                grid=(r_tiles,),
                in_specs=[
                    pl.BlockSpec((TM, M_pad), lambda i: (i, 0)),
                    pl.BlockSpec((M_pad, N_pad), lambda i: (0, 0)),   # resident W
                    pl.BlockSpec((1, N_pad), lambda i: (0, 0)),       # resident bias
                ],
                out_specs=pl.BlockSpec((TM, N_pad), lambda i: (i, 0)),
            ),
            compiler_params=cp(("parallel",)),
        )(x2d, W, bias)
    elif k_tiles == 1:
        out = pl.pallas_call(
            _dense_direct_kernel,
            out_shape=out_shape,
            grid_spec=pltpu.PrefetchScalarGridSpec(
                num_scalar_prefetch=0,
                grid=(r_tiles, n_tiles),
                in_specs=[
                    pl.BlockSpec((TM, M_pad), lambda i, j: (i, 0)),
                    pl.BlockSpec((M_pad, TN), lambda i, j: (0, j)),
                    pl.BlockSpec((1, TN), lambda i, j: (0, j)),
                ],
                out_specs=pl.BlockSpec((TM, TN), lambda i, j: (i, j)),
            ),
            compiler_params=cp(("parallel", "parallel")),
        )(x2d, W, bias)
    else:
        out = pl.pallas_call(
            _dense_acc_kernel,
            out_shape=out_shape,
            grid_spec=pltpu.PrefetchScalarGridSpec(
                num_scalar_prefetch=0,
                grid=(r_tiles, n_tiles, k_tiles),
                in_specs=[
                    pl.BlockSpec((TM, TK), lambda i, j, k: (i, k)),
                    pl.BlockSpec((TK, TN), lambda i, j, k: (k, j)),
                    pl.BlockSpec((1, TN), lambda i, j, k: (0, j)),
                ],
                out_specs=pl.BlockSpec((TM, TN), lambda i, j, k: (i, j)),
                scratch_shapes=[pltpu.VMEM((TM, TN), jnp.float32)],
            ),
            compiler_params=cp(("parallel", "parallel", "arbitrary")),
        )(x2d, W, bias)
    return out[:R, :N]


# ----------------------------------------------------------------------------
# groups == 1, channel-last:  y[b,n,c] = sum_m W[m,n] x[b,m,c] + bias[0,n]
# (no activation transposes; only the small weight is transposed once)
# ----------------------------------------------------------------------------
def conv1d1x1_dense_cl(x, W, bias):
    B, M, C = x.shape
    N = W.shape[1]
    _, vmem_limit = _tpu_config()
    budget = (vmem_limit * 3) // 4
    isize = x.dtype.itemsize

    N_sub = _round_up(N, 8)                              # output sublane dim

    if M <= 2048:
        TK, M_pad, k_tiles = M, M, 1
    else:
        M128 = _round_up(M, 128)
        k_tiles = _cdiv(M128, 512)
        TK = _round_up(_cdiv(M128, k_tiles), 128)
        M_pad = TK * k_tiles

    if C < 128:
        TC, C_pad, c_tiles = C, C, 1
    else:
        C128 = _round_up(C, 128)
        tc_target = 512
        while True:
            c_tiles = max(1, _cdiv(C128, tc_target))
            TC = _round_up(_cdiv(C128, c_tiles), 128)
            need = (2 * N_sub * TK + 2 * TK * TC + 2 * N_sub * TC) * isize
            if k_tiles > 1:
                need += N_sub * TC * 4
            if need <= budget or tc_target <= 128:
                break
            tc_target = max(128, tc_target // 2)
        C_pad = TC * c_tiles

    if (M_pad, C_pad) != (M, C):
        x = jnp.pad(x, ((0, 0), (0, M_pad - M), (0, C_pad - C)))
    Wp = W
    if (M_pad, N_sub) != W.shape:
        Wp = jnp.pad(W, ((0, M_pad - W.shape[0]), (0, N_sub - W.shape[1])))
    Wt = Wp.T                                            # (N_sub, M_pad), tiny
    bias_col = bias
    if N_sub != bias.shape[1]:
        bias_col = jnp.pad(bias, ((0, 0), (0, N_sub - bias.shape[1])))
    bias_col = bias_col.T                                # (N_sub, 1)

    out_shape = jax.ShapeDtypeStruct((B, N_sub, C_pad), x.dtype)
    cp = lambda sem: pltpu.CompilerParams(dimension_semantics=sem,
                                          vmem_limit_bytes=vmem_limit)

    if k_tiles == 1:
        out = pl.pallas_call(
            _cl_direct_kernel,
            out_shape=out_shape,
            grid_spec=pltpu.PrefetchScalarGridSpec(
                num_scalar_prefetch=0,
                grid=(B, c_tiles),
                in_specs=[
                    pl.BlockSpec((N_sub, M_pad), lambda b, c: (0, 0)),  # resident W^T
                    pl.BlockSpec((1, M_pad, TC), lambda b, c: (b, 0, c)),
                    pl.BlockSpec((N_sub, 1), lambda b, c: (0, 0)),
                ],
                out_specs=pl.BlockSpec((1, N_sub, TC), lambda b, c: (b, 0, c)),
            ),
            compiler_params=cp(("parallel", "parallel")),
        )(Wt, x, bias_col)
    else:
        out = pl.pallas_call(
            _cl_acc_kernel,
            out_shape=out_shape,
            grid_spec=pltpu.PrefetchScalarGridSpec(
                num_scalar_prefetch=0,
                grid=(B, c_tiles, k_tiles),
                in_specs=[
                    pl.BlockSpec((N_sub, TK), lambda b, c, k: (0, k)),
                    pl.BlockSpec((1, TK, TC), lambda b, c, k: (b, k, c)),
                    pl.BlockSpec((N_sub, 1), lambda b, c, k: (0, 0)),
                ],
                out_specs=pl.BlockSpec((1, N_sub, TC), lambda b, c, k: (b, 0, c)),
                scratch_shapes=[pltpu.VMEM((N_sub, TC), jnp.float32)],
            ),
            compiler_params=cp(("parallel", "parallel", "arbitrary")),
        )(Wt, x, bias_col)
    return out[:, :N, :C]


# ----------------------------------------------------------------------------
# groups > 1, channel-first:  y[b,g,n] = sum_m x[b,g,m] W[g,m,n] + bias[g,n]
# (reads [B, G, M] directly; writes [B, G, N] via a flat lane-major view)
# ----------------------------------------------------------------------------
def conv1d1x1_grouped(x, W, bias):
    B, G, M = x.shape
    N = W.shape[2]
    lane_align, vmem_limit = _tpu_config()
    budget = (vmem_limit * 3) // 4
    isize = x.dtype.itemsize
    sub = _sublane(isize)

    n_align = 128 if N <= 128 else lane_align
    N_pad = _round_up(N, n_align)

    # groups per block
    if G <= 16:
        GB, G_pad = G, G
    else:
        GB = 16
        if 2 * GB * M * N_pad * isize > budget // 2:
            GB = 8
        G_pad = _round_up(G, GB)
    g_tiles = G_pad // GB
    # TODO(synk): add K/N tiling inside the grouped path for very large
    # per-group cin*cout (W block here is (GB, M, N_pad)).

    # batch rows per block (inner grid axis -> per-group W stays resident)
    fixed = 2 * GB * (M * N_pad + N_pad) * isize
    per_row = 2 * GB * (M + N_pad) * isize
    TB, B_pad = _fit_rows(B, sub, 512, per_row, fixed, budget)
    b_tiles = B_pad // TB

    if (B_pad, G_pad) != (B, G):
        x = jnp.pad(x, ((0, B_pad - B), (0, G_pad - G), (0, 0)))
    if (G_pad, N_pad) != (G, N):
        W = jnp.pad(W, ((0, G_pad - G), (0, 0), (0, N_pad - N)))
        bias = jnp.pad(bias, ((0, G_pad - G), (0, N_pad - N)))

    out_flat = pl.pallas_call(
        _grouped_kernel,
        out_shape=jax.ShapeDtypeStruct((B_pad, G_pad * N_pad), x.dtype),
        grid_spec=pltpu.PrefetchScalarGridSpec(
            num_scalar_prefetch=0,
            grid=(g_tiles, b_tiles),
            in_specs=[
                pl.BlockSpec((TB, GB, M), lambda g, b: (b, g, 0)),
                pl.BlockSpec((GB, M, N_pad), lambda g, b: (g, 0, 0)),
                pl.BlockSpec((GB, N_pad), lambda g, b: (g, 0)),
            ],
            out_specs=pl.BlockSpec((TB, GB * N_pad), lambda g, b: (b, g)),
        ),
        compiler_params=pltpu.CompilerParams(
            dimension_semantics=("parallel", "parallel"),
            vmem_limit_bytes=vmem_limit,
        ),
    )(x, W, bias)
    # free (contiguous) reshape, then strip padding
    return out_flat.reshape(B_pad, G_pad, N_pad)[:B, :G, :N]


def conv1d1x1_grouped_cl(x, W, bias):
    # TODO(synk): grouped channel-last ('bmc,cmn->bnc') keeps two wrapper
    # transposes; the group index is the lane axis of x, so a transpose-free
    # kernel would need per-lane gathers.
    xg = jnp.transpose(x, (0, 2, 1))              # [B, G, M]
    y = conv1d1x1_grouped(xg, W, bias)            # [B, G, N]
    return jnp.transpose(y, (0, 2, 1))            # [B, N, G]


# ----------------------------------------------------------------------------
# Module-equivalent wrapper
# ----------------------------------------------------------------------------
def conv1d1x1(x, W, bias, *, groups, cformat="channel-first"):
    if bias is None:
        if groups == 1:
            bias = jnp.zeros((1, W.shape[1]), dtype=x.dtype)
        else:
            bias = jnp.zeros((W.shape[0], W.shape[2]), dtype=x.dtype)
    if cformat == "channel-first":
        if groups == 1:
            B, C, M = x.shape
            out2d = _dense_matmul_2d(x.reshape(B * C, M), W, bias)
            return out2d.reshape(B, C, W.shape[1])
        return conv1d1x1_grouped(x, W, bias)
    elif cformat == "channel-last":
        if groups == 1:
            return conv1d1x1_dense_cl(x, W, bias)
        return conv1d1x1_grouped_cl(x, W, bias)
    else:
        raise AssertionError(f"unknown cformat {cformat}")


if __name__ == "__main__":
    key = jax.random.PRNGKey(0)
    ks = jax.random.split(key, 10)

    # ---- case 1: groups == 1, channel-first (resident-W path) ---------------
    B, C, cin, cout = 2, 4, 16, 32
    x1 = jax.random.normal(ks[0], (B, C, cin), dtype=jnp.float32)
    W1 = jax.random.normal(ks[1], (cin, cout), dtype=jnp.float32)
    b1 = 0.1 * jax.random.normal(ks[2], (1, cout), dtype=jnp.float32)
    y1 = jax.block_until_ready(conv1d1x1(x1, W1, b1, groups=1))
    ref1 = jnp.einsum("bcm,mn->bcn", x1, W1) + b1
    assert y1.shape == ref1.shape
    assert jnp.allclose(y1, ref1, atol=1e-5, rtol=1e-5)

    # ---- case 2: groups > 1, channel-first (transpose-free grouped path) ----
    G = 4
    x2 = jax.random.normal(ks[3], (B, G, cin), dtype=jnp.float32)
    W2 = jax.random.normal(ks[4], (G, cin, cout), dtype=jnp.float32)
    b2 = 0.1 * jax.random.normal(ks[5], (G, cout), dtype=jnp.float32)
    y2 = jax.block_until_ready(conv1d1x1(x2, W2, b2, groups=G))
    ref2 = jnp.einsum("bcm,cmn->bcn", x2, W2) + b2
    assert y2.shape == ref2.shape
    assert jnp.allclose(y2, ref2, atol=1e-5, rtol=1e-5)

    # ---- case 3: groups == 1, channel-last (no activation transposes) -------
    x3 = jax.random.normal(ks[6], (B, cin, C), dtype=jnp.float32)     # [b, m, c]
    y3 = jax.block_until_ready(conv1d1x1(x3, W1, b1, groups=1, cformat="channel-last"))
    ref3 = jnp.einsum("bmc,mn->bnc", x3, W1) + b1.T
    assert y3.shape == ref3.shape
    assert jnp.allclose(y3, ref3, atol=1e-5, rtol=1e-5)

    # ---- case 4: groups > 1, channel-last ------------------------------------
    x4 = jax.random.normal(ks[7], (B, cin, G), dtype=jnp.float32)     # [b, m, g]
    y4 = jax.block_until_ready(conv1d1x1(x4, W2, b2, groups=G, cformat="channel-last"))
    ref4 = jnp.einsum("bmc,cmn->bnc", x4, W2) + b2.T
    assert y4.shape == ref4.shape
    assert jnp.allclose(y4, ref4, atol=1e-5, rtol=1e-5)

    # ---- case 5: dense, K-tiled accumulator path (cin > 2048, rows tiled) ---
    B5, C5, cin5, cout5 = 2, 257, 2200, 300
    x5 = jax.random.normal(ks[8], (B5, C5, cin5), dtype=jnp.float32)
    W5 = jax.random.normal(ks[9], (cin5, cout5), dtype=jnp.float32) / jnp.sqrt(cin5)
    b5 = jnp.zeros((1, cout5), dtype=jnp.float32)
    y5 = jax.block_until_ready(conv1d1x1(x5, W5, b5, groups=1))
    ref5 = jnp.einsum("bcm,mn->bcn", x5, W5) + b5
    assert y5.shape == ref5.shape
    assert jnp.allclose(y5, ref5, atol=5e-3, rtol=5e-4)

    # ---- case 6: dense, N-tiled direct path (cout > 1024, no accumulator) ---
    B6, C6, cin6, cout6 = 2, 10, 64, 1300
    x6 = jax.random.normal(ks[0], (B6, C6, cin6), dtype=jnp.float32)
    W6 = jax.random.normal(ks[1], (cin6, cout6), dtype=jnp.float32)
    b6 = 0.1 * jax.random.normal(ks[2], (1, cout6), dtype=jnp.float32)
    y6 = jax.block_until_ready(conv1d1x1(x6, W6, b6, groups=1))
    ref6 = jnp.einsum("bcm,mn->bcn", x6, W6) + b6
    assert y6.shape == ref6.shape
    assert jnp.allclose(y6, ref6, atol=1e-3, rtol=1e-4)

    print("KERNEL_OK")
</pallas_src>

<mosaic_0001>
module attributes {stable_mosaic.version = 11 : i64} {
  func.func @_dense_direct_kernel(%arg0: i32, %arg1: memref<8x16xf32, #tpu.memory_space<vmem>>, %arg2: memref<16x128xf32, #tpu.memory_space<vmem>>, %arg3: memref<1x128xf32, #tpu.memory_space<vmem>>, %arg4: memref<8x128xf32, #tpu.memory_space<vmem>>) attributes {dimension_semantics = [#tpu.dimension_semantics<parallel>], iteration_bounds = array<i64: 1>, scalar_prefetch = 0 : i64, scratch_operands = 0 : i64, tpu.core_type = #tpu.core_type<tc>, window_params = [{transform_indices = @transform_0, window_bounds = array<i64: 8, 16>}, {pipeline_mode = #tpu.pipeline_mode<synchronous>, transform_indices = @transform_1, window_bounds = array<i64: 16, 128>}, {pipeline_mode = #tpu.pipeline_mode<synchronous>, transform_indices = @transform_2, window_bounds = array<i64: 1, 128>}, {transform_indices = @transform_3, window_bounds = array<i64: 8, 128>}]} {
    %c0 = arith.constant 0 : index
    %c0_0 = arith.constant 0 : index
    %0 = vector.load %arg1[%c0, %c0_0] : memref<8x16xf32, #tpu.memory_space<vmem>>, vector<8x16xf32>
    %c0_1 = arith.constant 0 : index
    %c0_2 = arith.constant 0 : index
    %1 = vector.load %arg2[%c0_1, %c0_2] : memref<16x128xf32, #tpu.memory_space<vmem>>, vector<16x128xf32>
    %cst = arith.constant dense<0.000000e+00> : vector<8x128xf32>
    %2 = tpu.matmul %0, %1, %cst {dimension_numbers = #tpu.dot_dimension_numbers<[1], [0], [0], [1], [0, 0, 1, 1], [], []>} : vector<8x16xf32>, vector<16x128xf32>, vector<8x128xf32> -> vector<8x128xf32>
    %c0_3 = arith.constant 0 : index
    %c0_4 = arith.constant 0 : index
    %3 = vector.load %arg3[%c0_3, %c0_4] : memref<1x128xf32, #tpu.memory_space<vmem>>, vector<1x128xf32>
    %4 = vector.broadcast %3 : vector<1x128xf32> to vector<8x128xf32>
    %5 = arith.addf %2, %4 : vector<8x128xf32>
    %c0_5 = arith.constant 0 : index
    %c0_6 = arith.constant 0 : index
    %6 = vector.load %arg4[%c0_5, %c0_6] : memref<8x128xf32, #tpu.memory_space<vmem>>, vector<8x128xf32>
    tpu.vector_store %arg4[%c0_5, %c0_6], %5 {strides = array<i32>} : memref<8x128xf32, #tpu.memory_space<vmem>>, vector<8x128xf32>,
    return
  }
  func.func @transform_0(%arg0: i32) -> (i32, i32) {
    %c0_i32 = arith.constant 0 : i32
    %c0_i32_0 = arith.constant 0 : i32
    return %arg0, %c0_i32 : i32, i32
  }
  func.func @transform_1(%arg0: i32) -> (i32, i32) {
    %c0_i32 = arith.constant 0 : i32
    %c0_i32_0 = arith.constant 0 : i32
    %c0_i32_1 = arith.constant 0 : i32
    return %c0_i32, %c0_i32_0 : i32, i32
  }
  func.func @transform_2(%arg0: i32) -> (i32, i32) {
    %c0_i32 = arith.constant 0 : i32
    %c0_i32_0 = arith.constant 0 : i32
    %c0_i32_1 = arith.constant 0 : i32
    return %c0_i32, %c0_i32_0 : i32, i32
  }
  func.func @transform_3(%arg0: i32) -> (i32, i32) {
    %c0_i32 = arith.constant 0 : i32
    %c0_i32_0 = arith.constant 0 : i32
    return %arg0, %c0_i32 : i32, i32
  }
}

</mosaic_0001>

<llo_original>
// kernel: tpu_custom_call.1
$region0: #{tpu_custom_call.1}
  #allocation0 [shape = 'u32[]', space=smem, size = 0x4, offset = 0x4, fixed_abs, tag = 'smem constant byte address 0x4 - core index']
  #allocation1 [shape = 'u32[144,128]{1,0:T(1,128)}', space=vmem, size = 0x12000, scoped, tag = 'internal scratch']
  %s0 = inlined_call_operand.hbm [shape: f32[8,16], index: 0, kind: input, shape index: {}]
  %s1 = inlined_call_operand.hbm [shape: f32[16,128], index: 1, kind: input, shape index: {}]
  %s2 = inlined_call_operand.vmem [shape: f32[1,128], index: 2, kind: input, shape index: {}]
  %s3 = inlined_call_operand.hbm [shape: f32[8,128], index: 3, kind: output, shape index: {}]
  %s4 = sld [smem:[#allocation0]]
  $region30: #{tpu_custom_call.1} parent=0
    _
  %s6 = ssub.s32 1, %s4
  %s7 = scalar_select 0, %s6, %s4
  $region1: #{tpu_custom_call.1} parent=0
    #allocation2 [shape = 'u8[4096]{0}', space=vmem, size = 0x1000, scoped, tag = 'input window, operand 0, single buffered']
    #allocation3 [shape = 's32[1]{0}', space=sflag, size = 0x4, scoped, tag = 'scoped memory for tpu_custom_call.1']
    #allocation4 [shape = 's32[1]{0}', space=sflag, size = 0x4, scoped, tag = 'scoped memory for tpu_custom_call.1']
    #allocation5 [shape = 'u8[8192]{0}', space=vmem, size = 0x2000, scoped, tag = 'input window, operand 1, single buffered']
    #allocation6 [shape = 's32[1]{0}', space=sflag, size = 0x4, scoped, tag = 'scoped memory for tpu_custom_call.1']
    #allocation7 [shape = 'u8[4096]{0}', space=vmem, size = 0x1000, scoped, tag = 'output window, operand 0, single buffered']
    %8 = vsyncpa [#allocation3], 0
    %9 = vsyncpa [#allocation6], 0
    %10 = vsyncpa [#allocation4], 0
    // Predicated region
    $region2: #{tpu_custom_call.1} parent=1 // pred_check
      _
    $region3: #{tpu_custom_call.1} parent=1 // pred_check_branch
      %12 = sbr.rel (0) target = $region5
    $region4: #{tpu_custom_call.1} parent=1 // pred_region
      %s14 = ssub.s32 128, 128
      %15 = vsyncadd [#allocation3], %s14
      %s17 = sshll.u32 [#allocation2], 4
      %s18 = int_to_ptr.vmem [resolvable:$true] %s17
      %20 = dma.hbm_to_vmem [thread:$0]  %s0, 128, %s18, [#allocation3]
    $region5: #{tpu_custom_call.1} parent=1 // pred_fallthru
      _
    // Predicated region
    $region6: #{tpu_custom_call.1} parent=1 // pred_check
      _
    $region7: #{tpu_custom_call.1} parent=1 // pred_check_branch
      %22 = sbr.rel (0) target = $region9
    $region8: #{tpu_custom_call.1} parent=1 // pred_region
      %s24 = ssub.s32 256, 256
      %25 = vsyncadd [#allocation6], %s24
      %s26 = sshll.u32 [#allocation5], 4
      %s27 = int_to_ptr.vmem [resolvable:$true] %s26
      %32 = dma.hbm_to_vmem [thread:$0]  %s1, 256, %s27, [#allocation6], 128, 128, 8
    $region9: #{tpu_custom_call.1} parent=1 // pred_fallthru
      _
    // Predicated region
    $region10: #{tpu_custom_call.1} parent=1 // pred_check
      _
    $region11: #{tpu_custom_call.1} parent=1 // pred_check_branch
      %34 = sbr.rel (0) target = $region13
    $region12: #{tpu_custom_call.1} parent=1 // pred_region
      _
    $region13: #{tpu_custom_call.1} parent=1 // pred_fallthru
      _
    // Predicated region
    $region14: #{tpu_custom_call.1} parent=1 // pred_check
      _
    $region15: #{tpu_custom_call.1} parent=1 // pred_check_branch
      %36 = sbr.rel (0) target = $region17
    $region16: #{tpu_custom_call.1} parent=1 // pred_region
      %37 = dma.done [#allocation3], 128
    $region17: #{tpu_custom_call.1} parent=1 // pred_fallthru
      _
    // Predicated region
    $region18: #{tpu_custom_call.1} parent=1 // pred_check
      _
    $region19: #{tpu_custom_call.1} parent=1 // pred_check_branch
      %39 = sbr.rel (0) target = $region21
    $region20: #{tpu_custom_call.1} parent=1 // pred_region
      %40 = dma.done [#allocation6], 256
    $region21: #{tpu_custom_call.1} parent=1 // pred_fallthru
      _
    %v41 = vld [vmem:[#allocation2] sm:$0xff]
    %v42 = vld [vmem:[#allocation5] sm:$0xff]
    %v43 = vld [vmem:[#allocation5 + $0x8] sm:$0xff]
    %v44 = vld [vmem:[%s2] sm:$0x1]
    %v46 = vlaneseq
    %v47 = vshrl.u32 %v46, 7
    %v48 = vsub.s32 0, %v47
    %v49 = vrot.slane %v44, %v48
    %vm51 = vcmask 130048
    %v53 = vsel %vm51, %v41, 0
    %55 = vmatprep.subr.mxu0 0.0
    %56 = vmatpush1.msra.mxu0 0.0
    %57 = vmatprep.subr.mxu0 0.0
    %58 = vmatpush1.msra.mxu0 0.0
    %59 = vmatprep.subr.mxu0 0.0
    %60 = vmatpush1.msra.mxu0 0.0
    %61 = vmatprep.subr.mxu0 0.0
    %62 = vmatpush1.msra.mxu0 0.0
    %63 = vmatprep.subr.mxu0 0.0
    %64 = vmatpush1.msra.mxu0 0.0
    %65 = vmatprep.subr.mxu0 0.0
    %66 = vmatpush1.msra.mxu0 0.0
    %67 = vmatprep.subr.mxu0 0.0
    %68 = vmatpush1.msra.mxu0 0.0
    %69 = vmatprep.subr.mxu0 0.0
    %70 = vmatpush1.msra.mxu0 0.0
    %71 = vmatprep.subr.mxu0 0.0
    %72 = vmatpush1.msra.mxu0 0.0
    %73 = vmatprep.subr.mxu0 0.0
    %74 = vmatpush1.msra.mxu0 0.0
    %75 = vmatprep.subr.mxu0 0.0
    %76 = vmatpush1.msra.mxu0 0.0
    %77 = vmatprep.subr.mxu0 0.0
    %78 = vmatpush1.msra.mxu0 0.0
    %79 = vmatprep.subr.mxu0 0.0
    %80 = vmatpush1.msra.mxu0 0.0
    %81 = vmatprep.subr.mxu0 0.0
    %82 = vmatpush1.msra.mxu0 0.0
    %83 = vmatprep.subr.mxu0 0.0
    %84 = vmatpush1.msra.mxu0 %v43
    %85 = vmatprep.subr.mxu0 0.0
    %86 = vmatpush1.msra.mxu0 %v42
    %87 = vmatprep.subr.mxu0 0.0
    %88 = vmatpush2.msra.mxu0 0.0
    %89 = vmatprep.subr.mxu0 0.0
    %90 = vmatpush2.msra.mxu0 0.0
    %91 = vmatprep.subr.mxu0 0.0
    %92 = vmatpush2.msra.mxu0 0.0
    %93 = vmatprep.subr.mxu0 0.0
    %94 = vmatpush2.msra.mxu0 0.0
    %95 = vmatprep.subr.mxu0 0.0
    %96 = vmatpush2.msra.mxu0 0.0
    %97 = vmatprep.subr.mxu0 0.0
    %98 = vmatpush2.msra.mxu0 0.0
    %99 = vmatprep.subr.mxu0 0.0
    %100 = vmatpush2.msra.mxu0 0.0
    %101 = vmatprep.subr.mxu0 0.0
    %102 = vmatpush2.msra.mxu0 0.0
    %103 = vmatprep.subr.mxu0 0.0
    %104 = vmatpush2.msra.mxu0 0.0
    %105 = vmatprep.subr.mxu0 0.0
    %106 = vmatpush2.msra.mxu0 0.0
    %107 = vmatprep.subr.mxu0 0.0
    %108 = vmatpush2.msra.mxu0 0.0
    %109 = vmatprep.subr.mxu0 0.0
    %110 = vmatpush2.msra.mxu0 0.0
    %111 = vmatprep.subr.mxu0 0.0
    %112 = vmatpush2.msra.mxu0 0.0
    %113 = vmatprep.subr.mxu0 0.0
    %114 = vmatpush2.msra.mxu0 0.0
    %115 = vmatprep.subr.mxu0 0.0
    %116 = vmatpush2.msra.mxu0 0.0
    %117 = vmatprep.subr.mxu0 0.0
    %118 = vmatpush2.msra.mxu0 0.0
    %119 = vmatprep.mubr.f32.mxu0 0.0
    %120 = vmatmul.mubr.f32.gmra.mxu0 %v53
    %v121 = vpop.f32.mrf.mxu0
    %v122 = vadd.f32 %v49, %v121
    %v123 = vpop.f32.mrf.mxu0
    %124 = vdwg.mxu0
    %125 = vst [vmem:[#allocation7] sm:$0xff] %v122
    // Predicated region
    $region22: #{tpu_custom_call.1} parent=1 // pred_check
      _
    $region23: #{tpu_custom_call.1} parent=1 // pred_check_branch
      %127 = sbr.rel (0) target = $region25
    $region24: #{tpu_custom_call.1} parent=1 // pred_region
      %s129 = ssub.s32 128, 128
      %130 = vsyncadd [#allocation4], %s129
      %s132 = sshll.u32 [#allocation7], 4
      %s133 = int_to_ptr.vmem [resolvable:$true] %s132
      %135 = dma.vmem_to_hbm [thread:$0]  %s133, 128, %s3, [#allocation4]
    $region25: #{tpu_custom_call.1} parent=1 // pred_fallthru
      _
    // Predicated region
    $region26: #{tpu_custom_call.1} parent=1 // pred_check
      _
    $region27: #{tpu_custom_call.1} parent=1 // pred_check_branch
      %137 = sbr.rel (0) target = $region29
    $region28: #{tpu_custom_call.1} parent=1 // pred_region
      %138 = dma.done [#allocation4], 128
    $region29: #{tpu_custom_call.1} parent=1 // pred_fallthru
      _
    %139 = vsyncpa [#allocation3], 1
    %140 = vsyncpa [#allocation6], 1
    %141 = vsyncpa [#allocation4], 1

</llo_original>
